<compile_context>
chip_gen: v7x
topology: tpu7x:2x2x1
jax: 0.10.0
libtpu: 0.0.40
codegen_flags: <defaults>
</compile_context>

<pallas_src>
import jax
import jax.numpy as jnp
from jax.experimental import pallas as pl
from jax.experimental.pallas import tpu as pltpu


def _linear_kernel(x_ref, w_ref, b_ref, o_ref):
    # x_ref: (TM, F) VMEM tile, w_ref: (1, F) VMEM (lane-dense), b_ref: (1,) SMEM.
    x = x_ref[...]                                   # (TM, F) f32
    w = w_ref[...]                                   # (1, F), broadcasts over rows
    acc = jnp.sum(x * w, axis=-1, keepdims=True)     # (TM, 1) f32 on VPU/XLU
    o_ref[...] = (acc + b_ref[0]).astype(o_ref.dtype)


def _pick_batch_tile(batch, n_feature, vmem_budget_bytes):
    # Dominant VMEM user is the double-buffered x tile: 2 * TM * F * 4B
    # (F lane-padded to >=128).  Use ~1/4 of the scoped budget for x so there
    # is headroom for the weight row, output tile and pipeline bookkeeping.
    bytes_per_row = max(n_feature, 128) * 4
    budget_for_x = vmem_budget_bytes // 4
    max_rows = max(8, budget_for_x // (2 * bytes_per_row))
    tm = min(512, max_rows, max(batch, 8))
    tm = max(8, (tm // 8) * 8)                       # sublane (8, 128) rule
    return tm


def linear_net_forward(x, weight, bias, *, vmem_limit_bytes=32 * 1024 * 1024):
    """Pallas equivalent of LinearNet.forward.

    x:      (batch, n_feature) float32
    weight: (1, n_feature)     float32  (PyTorch nn.Linear weight layout)
    bias:   (1,)               float32
    returns (batch, 1)         float32
    """
    batch, n_feature = x.shape
    assert weight.shape == (1, n_feature)
    assert bias.shape == (1,)

    tm = _pick_batch_tile(batch, n_feature, vmem_limit_bytes)

    # Pad the batch so every grid step sees a full (tm, F) tile.
    padded = pl.cdiv(batch, tm) * tm
    if padded != batch:
        x = jnp.pad(x, ((0, padded - batch), (0, 0)))

    out = pl.pallas_call(
        _linear_kernel,
        out_shape=jax.ShapeDtypeStruct((padded, 1), x.dtype),
        grid=(padded // tm,),
        in_specs=[
            pl.BlockSpec((tm, n_feature), lambda i: (i, 0)),       # x tile (pipelined)
            pl.BlockSpec((1, n_feature), lambda i: (0, 0)),        # weight row (resident)
            pl.BlockSpec(memory_space=pltpu.MemorySpace.SMEM),     # bias scalar in SMEM
        ],
        out_specs=pl.BlockSpec((tm, 1), lambda i: (i, 0)),
        compiler_params=pltpu.CompilerParams(
            dimension_semantics=("parallel",),     # batch tiles across TCs on v7x
            vmem_limit_bytes=vmem_limit_bytes,
        ),
        cost_estimate=pl.CostEstimate(
            flops=2 * padded * n_feature,
            transcendentals=0,
            bytes_accessed=4 * (padded * n_feature + n_feature + padded),
        ),
    )(x, weight, bias)

    return out[:batch]


if __name__ == "__main__":
    key = jax.random.PRNGKey(0)
    kx, kw, _ = jax.random.split(key, 3)

    batch = 8
    n_feature = 2  # classic lireg example uses 2 input features

    x = jax.random.normal(kx, (batch, n_feature), dtype=jnp.float32)
    # Mirrors the tutorial's init.normal_(w, 0, 0.01), b = 0
    weight = 0.01 * jax.random.normal(kw, (1, n_feature), dtype=jnp.float32)
    bias = jnp.zeros((1,), dtype=jnp.float32)

    y = linear_net_forward(x, weight, bias)
    y = jax.block_until_ready(y)

    # Reference check against plain JAX (same math as PyTorch nn.Linear)
    y_ref = x @ weight.T + bias
    assert y.shape == (batch, 1)
    assert jnp.allclose(y, y_ref, atol=1e-5, rtol=1e-5)

    print("KERNEL_OK")
</pallas_src>

<mosaic_0001>
module attributes {stable_mosaic.version = 11 : i64} {
  func.func @_linear_kernel(%arg0: i32, %arg1: memref<8x2xf32, #tpu.memory_space<vmem>>, %arg2: memref<1x2xf32, #tpu.memory_space<vmem>>, %arg3: memref<1xf32, #tpu.memory_space<smem>>, %arg4: memref<8x1xf32, #tpu.memory_space<vmem>>) attributes {dimension_semantics = [#tpu.dimension_semantics<parallel>], iteration_bounds = array<i64: 1>, scalar_prefetch = 0 : i64, scratch_operands = 0 : i64, tpu.core_type = #tpu.core_type<tc>, window_params = [{transform_indices = @transform_0, window_bounds = array<i64: 8, 2>}, {pipeline_mode = #tpu.pipeline_mode<synchronous>, transform_indices = @transform_1, window_bounds = array<i64: 1, 2>}, {transform_indices = @transform_2, window_bounds = array<i64: 1>}, {transform_indices = @transform_3, window_bounds = array<i64: 8, 1>}]} {
    %c0 = arith.constant 0 : index
    %c0_0 = arith.constant 0 : index
    %0 = vector.load %arg1[%c0, %c0_0] : memref<8x2xf32, #tpu.memory_space<vmem>>, vector<8x2xf32>
    %c0_1 = arith.constant 0 : index
    %c0_2 = arith.constant 0 : index
    %1 = vector.load %arg2[%c0_1, %c0_2] : memref<1x2xf32, #tpu.memory_space<vmem>>, vector<1x2xf32>
    %2 = vector.broadcast %1 : vector<1x2xf32> to vector<8x2xf32>
    %3 = arith.mulf %0, %2 : vector<8x2xf32>
    %cst = arith.constant dense<0.000000e+00> : vector<8xf32>
    %4 = vector.multi_reduction <add>, %3, %cst [1] : vector<8x2xf32> to vector<8xf32>
    %5 = vector.shape_cast %4 : vector<8xf32> to vector<8x1xf32>
    %c0_3 = arith.constant 0 : index
    %6 = memref.load %arg3[%c0_3] : memref<1xf32, #tpu.memory_space<smem>>
    %7 = vector.broadcast %6 : f32 to vector<8x1xf32>
    %8 = arith.addf %5, %7 : vector<8x1xf32>
    %c0_4 = arith.constant 0 : index
    %c0_5 = arith.constant 0 : index
    %9 = vector.load %arg4[%c0_4, %c0_5] : memref<8x1xf32, #tpu.memory_space<vmem>>, vector<8x1xf32>
    tpu.vector_store %arg4[%c0_4, %c0_5], %8 {strides = array<i32>} : memref<8x1xf32, #tpu.memory_space<vmem>>, vector<8x1xf32>,
    return
  }
  func.func @transform_0(%arg0: i32) -> (i32, i32) {
    %c0_i32 = arith.constant 0 : i32
    %c0_i32_0 = arith.constant 0 : i32
    return %arg0, %c0_i32 : i32, i32
  }
  func.func @transform_1(%arg0: i32) -> (i32, i32) {
    %c0_i32 = arith.constant 0 : i32
    %c0_i32_0 = arith.constant 0 : i32
    %c0_i32_1 = arith.constant 0 : i32
    return %c0_i32, %c0_i32_0 : i32, i32
  }
  func.func @transform_2(%arg0: i32) -> i32 {
    %c0_i32 = arith.constant 0 : i32
    %c0_i32_0 = arith.constant 0 : i32
    return %c0_i32 : i32
  }
  func.func @transform_3(%arg0: i32) -> (i32, i32) {
    %c0_i32 = arith.constant 0 : i32
    %c0_i32_0 = arith.constant 0 : i32
    return %arg0, %c0_i32 : i32, i32
  }
}

</mosaic_0001>

<llo_original>
// kernel: tpu_custom_call.1
$region0: #{tpu_custom_call.1}
  #allocation0 [shape = 'u32[]', space=smem, size = 0x4, offset = 0x4, fixed_abs, tag = 'smem constant byte address 0x4 - core index']
  #allocation1 [shape = 'u32[144,128]{1,0:T(1,128)}', space=vmem, size = 0x12000, scoped, tag = 'internal scratch']
  #allocation2 [shape = 'f32[1]{0:T(128)S(6)}', space=smem, size = 0x200, scoped, tag = 'scoped memory for tpu_custom_call.1']
  %s0 = inlined_call_operand.vmem [shape: f32[8,2], index: 0, kind: input, shape index: {}]
  %s1 = inlined_call_operand.vmem [shape: f32[1,2], index: 1, kind: input, shape index: {}]
  %s2 = inlined_call_operand.<no memory space> [shape: f32[1], index: 2, kind: input, shape index: {}]
  %s3 = inlined_call_operand.vmem [shape: f32[8,1], index: 3, kind: output, shape index: {}]
  %s4 = sld [smem:[#allocation0]]
  $region22: #{tpu_custom_call.1} parent=0
    _
  %s6 = ssub.s32 1, %s4
  %s7 = scalar_select 0, %s6, %s4
  %8 = sst [smem:[#allocation2]] %s2
  // Predicated region
  $region2: #{tpu_custom_call.1} parent=0 // pred_check
    _
  $region3: #{tpu_custom_call.1} parent=0 // pred_check_branch
    %10 = sbr.rel (0) target = $region5
  $region4: #{tpu_custom_call.1} parent=0 // pred_region
    _
  $region5: #{tpu_custom_call.1} parent=0 // pred_fallthru
    _
  // Predicated region
  $region6: #{tpu_custom_call.1} parent=0 // pred_check
    _
  $region7: #{tpu_custom_call.1} parent=0 // pred_check_branch
    %12 = sbr.rel (0) target = $region9
  $region8: #{tpu_custom_call.1} parent=0 // pred_region
    _
  $region9: #{tpu_custom_call.1} parent=0 // pred_fallthru
    _
  // Predicated region
  $region10: #{tpu_custom_call.1} parent=0 // pred_check
    _
  $region11: #{tpu_custom_call.1} parent=0 // pred_check_branch
    %14 = sbr.rel (0) target = $region13
  $region12: #{tpu_custom_call.1} parent=0 // pred_region
    _
  $region13: #{tpu_custom_call.1} parent=0 // pred_fallthru
    _
  %v15 = vld [vmem:[%s0] sm:$0xff]
  %v16 = vld [vmem:[%s1] sm:$0x1]
  %v18 = vlaneseq
  %v19 = vshrl.u32 %v18, 7
  %v20 = vsub.s32 0, %v19
  %v21 = vrot.slane %v16, %v20
  %v23 = vmul.f32 %v15, %v21
  %vm24 = vcmask 15360
  %v25 = vsel %vm24, %v23, 0.0
  %26 = vadd.xlane.f32.xlu0 %v25
  %v27 = vpop.xlane.xlu0 %26
  %s28 = sld [smem:[#allocation2]]
  %v29 = vstv %s28
  %v30 = vadd.f32 %v27, %v29
  %vm31 = vcmask 7168
  %32 = vst.msk [vmem:[%s3] sm:$0xff] %vm31, %v30
  // Predicated region
  $region14: #{tpu_custom_call.1} parent=0 // pred_check
    _
  $region15: #{tpu_custom_call.1} parent=0 // pred_check_branch
    %34 = sbr.rel (0) target = $region17
  $region16: #{tpu_custom_call.1} parent=0 // pred_region
    _
  $region17: #{tpu_custom_call.1} parent=0 // pred_fallthru
    _
  // Predicated region
  $region18: #{tpu_custom_call.1} parent=0 // pred_check
    _
  $region19: #{tpu_custom_call.1} parent=0 // pred_check_branch
    %36 = sbr.rel (0) target = $region21
  $region20: #{tpu_custom_call.1} parent=0 // pred_region
    _
  $region21: #{tpu_custom_call.1} parent=0 // pred_fallthru
    _

</llo_original>
